<compile_context>
chip_gen: v5e
topology: v5e:2x2
jax: 0.10.0
libtpu: 0.0.40
codegen_flags: <defaults>
</compile_context>

<pallas_src>
import jax
import jax.numpy as jnp
from jax.experimental import pallas as pl
from jax.experimental.pallas import tpu as pltpu


def _copy_kernel(x_ref, o_ref):
    # Pure vld/vst stream; both refs are (row_tile, size*size). No reshape in-body.
    o_ref[...] = x_ref[...]


def _pick_row_tile(rows, cols, itemsize, target_bytes=4 << 20):
    """Pick a row tile that (a) divides rows, (b) is a multiple of 8 (sublane
    rule), (c) keeps one block <= ~4 MiB (safe under v7x's 64 MiB VMEM with
    double-buffered in+out), and (d) gives >= 2 grid steps when possible so
    v7x's two TensorCores each take part of the copy."""
    if rows % 8 != 0:
        # A full-extent block is always legal regardless of the (8,128) rule.
        return rows
    best = None
    for r in range(8, rows, 8):                 # proper divisors -> >= 2 steps
        if rows % r == 0 and r * cols * itemsize <= target_bytes:
            best = r
    if best is None:
        best = rows if rows * cols * itemsize <= target_bytes else 8
    return best


def discriminator_format(x, size, frames_per_clip):
    """Pallas equivalent of DiscriminatorFormat(frames_per_clip).forward(x, size).

    Like torch .view, accepts any contiguous clip layout whose leading dim is
    the batch and whose numel equals B * 3*frames_per_clip * size * size,
    e.g. (B, frames_per_clip, 3, size, size) -> (B, 3*frames_per_clip, size, size).
    """
    B = x.shape[0]
    c_out = 3 * frames_per_clip
    assert x.size == B * c_out * size * size, "numel mismatch for the view"

    rows = B * c_out
    cols = size * size

    # Metadata-only in XLA: collapse (frames, rgb) into channels and flatten
    # spatial dims so the kernel sees a lane-dense slab (last dim = size*size).
    x2d = jnp.reshape(x, (rows, cols))

    itemsize = jnp.dtype(x.dtype).itemsize
    row_tile = _pick_row_tile(rows, cols, itemsize)
    grid = (rows // row_tile,)

    out2d = pl.pallas_call(
        _copy_kernel,
        out_shape=jax.ShapeDtypeStruct((rows, cols), x.dtype),
        grid=grid,
        in_specs=[pl.BlockSpec((row_tile, cols), lambda i: (i, 0))],
        out_specs=pl.BlockSpec((row_tile, cols), lambda i: (i, 0)),
        compiler_params=pltpu.CompilerParams(
            dimension_semantics=("parallel",)),
    )(x2d)

    # Metadata-only again: back to NCHW.
    return jnp.reshape(out2d, (B, c_out, size, size))


if __name__ == "__main__":
    key = jax.random.PRNGKey(0)

    # Small case (single full-extent block): B=2, frames_per_clip=2, size=16.
    frames_per_clip, size, B = 2, 16, 2
    x = jax.random.normal(key, (B, frames_per_clip, 3, size, size), jnp.float32)
    y = jax.block_until_ready(discriminator_format(x, size, frames_per_clip))
    y_ref = jnp.reshape(x, (B, 3 * frames_per_clip, size, size))
    assert y.shape == (B, 3 * frames_per_clip, size, size)
    assert y.dtype == x.dtype
    assert bool(jnp.array_equal(y, y_ref))

    # Slightly larger case exercising the tiled multi-step parallel path:
    # rows = 8*12 = 96 -> row_tile = 48, 2 grid steps, lane width 1024.
    frames_per_clip2, size2, B2 = 4, 32, 8
    x2 = jax.random.normal(key, (B2, frames_per_clip2, 3, size2, size2),
                           jnp.float32)
    y2 = jax.block_until_ready(discriminator_format(x2, size2, frames_per_clip2))
    y2_ref = jnp.reshape(x2, (B2, 3 * frames_per_clip2, size2, size2))
    assert bool(jnp.array_equal(y2, y2_ref))

    print("KERNEL_OK")
</pallas_src>

<mosaic_0001>
module attributes {stable_mosaic.version = 11 : i64} {
  func.func @_copy_kernel(%arg0: i32, %arg1: memref<12x256xf32, #tpu.memory_space<vmem>>, %arg2: memref<12x256xf32, #tpu.memory_space<vmem>>) attributes {dimension_semantics = [#tpu.dimension_semantics<parallel>], iteration_bounds = array<i64: 1>, scalar_prefetch = 0 : i64, scratch_operands = 0 : i64, tpu.core_type = #tpu.core_type<tc>, window_params = [{transform_indices = @transform_0, window_bounds = array<i64: 12, 256>}, {transform_indices = @transform_1, window_bounds = array<i64: 12, 256>}]} {
    %c0 = arith.constant 0 : index
    %c0_0 = arith.constant 0 : index
    %0 = vector.load %arg1[%c0, %c0_0] : memref<12x256xf32, #tpu.memory_space<vmem>>, vector<12x256xf32>
    %c0_1 = arith.constant 0 : index
    %c0_2 = arith.constant 0 : index
    %1 = vector.load %arg2[%c0_1, %c0_2] : memref<12x256xf32, #tpu.memory_space<vmem>>, vector<12x256xf32>
    tpu.vector_store %arg2[%c0_1, %c0_2], %0 {strides = array<i32>} : memref<12x256xf32, #tpu.memory_space<vmem>>, vector<12x256xf32>,
    return
  }
  func.func @transform_0(%arg0: i32) -> (i32, i32) {
    %c0_i32 = arith.constant 0 : i32
    %c0_i32_0 = arith.constant 0 : i32
    return %arg0, %c0_i32 : i32, i32
  }
  func.func @transform_1(%arg0: i32) -> (i32, i32) {
    %c0_i32 = arith.constant 0 : i32
    %c0_i32_0 = arith.constant 0 : i32
    return %arg0, %c0_i32 : i32, i32
  }
}

</mosaic_0001>

<llo_original>
// kernel: tpu_custom_call.1
$region0: #{tpu_custom_call.1}
  #allocation0 [shape = 'u32[]', space=smem, size = 0x4, offset = 0x4, fixed_abs, tag = 'smem constant byte address 0x4 - core index']
  #allocation1 [shape = 'u32[72,128]{1,0:T(1,128)}', space=vmem, size = 0x9000, scoped, tag = 'internal scratch']
  %s0 = inlined_call_operand.hbm [shape: f32[12,256], index: 0, kind: input, shape index: {}]
  %s1 = inlined_call_operand.hbm [shape: f32[12,256], index: 1, kind: output, shape index: {}]
  %s2 = sld [smem:[#allocation0]]
  $region18: #{tpu_custom_call.1} parent=0
    _
  %s4 = ssub.s32 1, %s2
  %s5 = scalar_select 0, %s4, %s2
  $region1: #{tpu_custom_call.1} parent=0
    #allocation2 [shape = 'u8[16384]{0}', space=vmem, size = 0x4000, scoped, tag = 'input window, operand 0, single buffered']
    #allocation3 [shape = 's32[1]{0}', space=sflag, size = 0x4, scoped, tag = 'scoped memory for tpu_custom_call.1']
    #allocation4 [shape = 's32[1]{0}', space=sflag, size = 0x4, scoped, tag = 'scoped memory for tpu_custom_call.1']
    #allocation5 [shape = 'u8[16384]{0}', space=vmem, size = 0x4000, scoped, tag = 'output window, operand 0, single buffered']
    %6 = vsyncpa [#allocation3], 0
    %7 = vsyncpa [#allocation4], 0
    // Predicated region
    $region2: #{tpu_custom_call.1} parent=1 // pred_check
      _
    $region3: #{tpu_custom_call.1} parent=1 // pred_check_branch
      %9 = sbr.rel (0) target = $region5
    $region4: #{tpu_custom_call.1} parent=1 // pred_region
      %11 = vsyncadd [#allocation3], 0
      %s12 = sshll.u32 %s0, 4
      %s13 = int_to_ptr.hbm [resolvable:$true] %s12
      %s14 = sshll.u32 [#allocation2], 4
      %s15 = int_to_ptr.vmem [resolvable:$true] %s14
      %20 = dma.hbm_to_vmem [thread:$0]  %s13, 512, %s15, [#allocation3], 256, 256, 16
    $region5: #{tpu_custom_call.1} parent=1 // pred_fallthru
      _
    // Predicated region
    $region6: #{tpu_custom_call.1} parent=1 // pred_check
      _
    $region7: #{tpu_custom_call.1} parent=1 // pred_check_branch
      %22 = sbr.rel (0) target = $region9
    $region8: #{tpu_custom_call.1} parent=1 // pred_region
      %24 = dma.done [#allocation3], 512
    $region9: #{tpu_custom_call.1} parent=1 // pred_fallthru
      _
    %v25 = vld [vmem:[#allocation2] sm:$0xff]
    %v26 = vld [vmem:[#allocation2 + $0x8] sm:$0xff]
    %v27 = vld [vmem:[#allocation2 + $0x10] sm:$0xf]
    %v28 = vld [vmem:[#allocation2 + $0x18] sm:$0xf]
    %29 = vst [vmem:[#allocation5] sm:$0xff] %v25
    %30 = vst [vmem:[#allocation5 + $0x8] sm:$0xff] %v26
    %31 = vst [vmem:[#allocation5 + $0x10] sm:$0xf] %v27
    %32 = vst [vmem:[#allocation5 + $0x18] sm:$0xf] %v28
    // Predicated region
    $region10: #{tpu_custom_call.1} parent=1 // pred_check
      _
    $region11: #{tpu_custom_call.1} parent=1 // pred_check_branch
      %34 = sbr.rel (0) target = $region13
    $region12: #{tpu_custom_call.1} parent=1 // pred_region
      %36 = vsyncadd [#allocation4], 0
      %s37 = sshll.u32 [#allocation5], 4
      %s38 = int_to_ptr.vmem [resolvable:$true] %s37
      %s39 = sshll.u32 %s1, 4
      %s40 = int_to_ptr.hbm [resolvable:$true] %s39
      %45 = dma.vmem_to_hbm [thread:$0]  %s38, 512, %s40, [#allocation4], 256, 256, 16
    $region13: #{tpu_custom_call.1} parent=1 // pred_fallthru
      _
    // Predicated region
    $region14: #{tpu_custom_call.1} parent=1 // pred_check
      _
    $region15: #{tpu_custom_call.1} parent=1 // pred_check_branch
      %47 = sbr.rel (0) target = $region17
    $region16: #{tpu_custom_call.1} parent=1 // pred_region
      %49 = dma.done [#allocation4], 512
    $region17: #{tpu_custom_call.1} parent=1 // pred_fallthru
      _
    %50 = vsyncpa [#allocation3], 1
    %51 = vsyncpa [#allocation4], 1

</llo_original>
